<compile_context>
chip_gen: v7x
topology: tpu7x:2x2x1
jax: 0.10.0
libtpu: 0.0.40
codegen_flags: <defaults>
</compile_context>

<pallas_src>
import functools

import jax
import jax.numpy as jnp
from jax.experimental import pallas as pl
from jax.experimental.pallas import tpu as pltpu


# ----------------------------------------------------------------------------
# Fast path: one block per TB batch elements, full (C, HW) resident.
# ----------------------------------------------------------------------------
def cam_kernel(x_ref, w1t_ref, w2t_ref, o_ref, *, inv_hw):
    # x_ref : (TB, C, HW)  native dtype
    # w1t_ref: (C, Ch)     = torch Linear(C, Ch).weight.T
    # w2t_ref: (Ch, C)     = torch Linear(Ch, C).weight.T
    x = x_ref[...]
    tb = x.shape[0]

    # Pooling over the spatial (lane) axis; sum accumulates in f32, max stays
    # in the native dtype (no materialized f32 copy of the block).
    avg = jnp.sum(x, axis=-1, dtype=jnp.float32) * inv_hw          # (TB, C)
    mx = jnp.max(x, axis=-1).astype(jnp.float32)                   # (TB, C)

    # Fused shared MLP: one pass of W1 over [avg; max], W2 applied once to the
    # summed hidden activations (valid: no biases in the CBAM MLP).
    pooled = jnp.concatenate([avg, mx], axis=0)                    # (2*TB, C)
    w1t = w1t_ref[...].astype(jnp.float32)                         # (C, Ch)
    w2t = w2t_ref[...].astype(jnp.float32)                         # (Ch, C)
    h = jnp.maximum(
        jnp.dot(pooled, w1t, preferred_element_type=jnp.float32), 0.0)
    feat = jnp.dot(h[:tb] + h[tb:], w2t,
                   preferred_element_type=jnp.float32)             # (TB, C)
    gate = jax.nn.sigmoid(feat).astype(x.dtype)                    # (TB, C)

    # Gating multiply in the activation dtype (bf16 on v6e/v7x stays bf16).
    o_ref[...] = (x * gate[:, :, None]).astype(o_ref.dtype)


def _choose_tb(B, per_b_cost, budget):
    """Batch tile from the VMEM budget (non-divisor TB allowed).

    Prefers >= 2 grid steps, and an even step count (v7x megacore balance).
    """
    tb = int(max(1, min(B, budget // max(per_b_cost, 1))))
    if B > 1 and tb >= B:
        tb = pl.cdiv(B, 2)
    nsteps = pl.cdiv(B, tb)
    if nsteps > 1 and nsteps % 2 == 1:
        tb2 = pl.cdiv(B, nsteps + 1)
        if tb2 >= 1 and pl.cdiv(B, tb2) % 2 == 0:
            tb = tb2
    return tb


# ----------------------------------------------------------------------------
# Fallback path (huge C*HW per image): two HW-tiled sweeps.
# ----------------------------------------------------------------------------
def _cam_pool_kernel(x_ref, w1t_ref, w2t_ref, g_ref, sum_acc, max_acc,
                     *, hw, thw, inv_hw):
    # grid = (B, n_hw); x_ref: (1, C, THW); g_ref: (1, C, 1) f32
    h = pl.program_id(1)
    n_hw = pl.num_programs(1)

    @pl.when(h == 0)
    def _():
        sum_acc[...] = jnp.zeros_like(sum_acc)
        max_acc[...] = jnp.full_like(max_acc, -jnp.inf)

    x = x_ref[...]
    # Mask the ragged tail tile (values past HW are unspecified).
    valid = hw - h * thw
    lane = jax.lax.broadcasted_iota(jnp.int32, (1, 1, thw), 2)
    mask = lane < valid
    zero = jnp.zeros((), x.dtype)
    neg = jnp.array(-jnp.inf, dtype=x.dtype)

    sum_acc[...] += jnp.sum(jnp.where(mask, x, zero), axis=-1,
                            dtype=jnp.float32)
    max_acc[...] = jnp.maximum(
        max_acc[...], jnp.max(jnp.where(mask, x, neg), axis=-1)
        .astype(jnp.float32))

    @pl.when(h == n_hw - 1)
    def _():
        avg = sum_acc[...] * inv_hw                                # (1, C)
        mx = max_acc[...]                                          # (1, C)
        pooled = jnp.concatenate([avg, mx], axis=0)                # (2, C)
        w1t = w1t_ref[...].astype(jnp.float32)
        w2t = w2t_ref[...].astype(jnp.float32)
        hh = jnp.maximum(
            jnp.dot(pooled, w1t, preferred_element_type=jnp.float32), 0.0)
        feat = jnp.dot(hh[:1] + hh[1:], w2t,
                       preferred_element_type=jnp.float32)         # (1, C)
        g_ref[...] = jax.nn.sigmoid(feat)[:, :, None]


def _cam_gate_kernel(x_ref, g_ref, o_ref):
    # x_ref: (1, C, THW), g_ref: (1, C, 1) f32
    x = x_ref[...]
    gate = g_ref[...].astype(x.dtype)
    o_ref[...] = (x * gate).astype(o_ref.dtype)


def _cam_forward_hw_tiled(x3, w1t, w2t, vmem_budget_bytes):
    B, C, HW = x3.shape
    itemsize = jnp.dtype(x3.dtype).itemsize

    # Largest 128-multiple spatial tile that fits (4 pipelined buffers + ~1
    # f32 temp per lane at TB=1).  TODO(synk): add C tiling if even THW=128
    # cannot fit (extremely large channel counts).
    per_lane_cost = C * (4 * itemsize + 4)
    thw = max(128, (vmem_budget_bytes // max(per_lane_cost, 1)) // 128 * 128)
    thw = min(thw, pl.cdiv(HW, 128) * 128)
    n_hw = pl.cdiv(HW, thw)

    w_bytes = (w1t.size * jnp.dtype(w1t.dtype).itemsize
               + w2t.size * jnp.dtype(w2t.dtype).itemsize)
    tile_native = C * thw * itemsize
    tile_f32 = C * thw * 4

    pool_need = 2 * tile_native + 2 * tile_f32 + w_bytes + (2 << 20)
    gate_need = 4 * tile_native + tile_f32 + (2 << 20)
    pool_limit = int(min(max(pool_need, 16 << 20), 48 << 20))
    gate_limit = int(min(max(gate_need, 16 << 20), 48 << 20))

    gate = pl.pallas_call(
        functools.partial(_cam_pool_kernel, hw=HW, thw=thw, inv_hw=1.0 / HW),
        out_shape=jax.ShapeDtypeStruct((B, C, 1), jnp.float32),
        grid_spec=pltpu.PrefetchScalarGridSpec(
            num_scalar_prefetch=0,
            grid=(B, n_hw),
            in_specs=[
                pl.BlockSpec((1, C, thw), lambda b, h: (b, 0, h)),
                pl.BlockSpec(w1t.shape, lambda b, h: (0, 0)),
                pl.BlockSpec(w2t.shape, lambda b, h: (0, 0)),
            ],
            out_specs=pl.BlockSpec((1, C, 1), lambda b, h: (b, 0, 0)),
            scratch_shapes=[pltpu.VMEM((1, C), jnp.float32),
                            pltpu.VMEM((1, C), jnp.float32)],
        ),
        compiler_params=pltpu.CompilerParams(
            dimension_semantics=("parallel", "arbitrary"),
            vmem_limit_bytes=pool_limit),
    )(x3, w1t, w2t)

    out3 = pl.pallas_call(
        _cam_gate_kernel,
        out_shape=jax.ShapeDtypeStruct((B, C, HW), x3.dtype),
        grid_spec=pltpu.PrefetchScalarGridSpec(
            num_scalar_prefetch=0,
            grid=(B, n_hw),
            in_specs=[
                pl.BlockSpec((1, C, thw), lambda b, h: (b, 0, h)),
                pl.BlockSpec((1, C, 1), lambda b, h: (b, 0, 0)),
            ],
            out_specs=pl.BlockSpec((1, C, thw), lambda b, h: (b, 0, h)),
        ),
        compiler_params=pltpu.CompilerParams(
            dimension_semantics=("parallel", "parallel"),
            vmem_limit_bytes=gate_limit),
    )(x3, gate)
    return out3


# ----------------------------------------------------------------------------
# Wrapper
# ----------------------------------------------------------------------------
def cam_forward(x, w1, w2, *, vmem_budget_bytes=32 << 20):
    """x: (B, C, H, W); w1: (C//ratio, C); w2: (C, C//ratio)."""
    B, C, H, W = x.shape
    HW = H * W
    x3 = x.reshape(B, C, HW)
    # One-time wrapper-side transpose so the kernel never transposes an RHS.
    w1t = jnp.transpose(w1)   # (C, Ch)
    w2t = jnp.transpose(w2)   # (Ch, C)

    itemsize = jnp.dtype(x.dtype).itemsize
    # Per-batch cost model: 2 in + 2 out pipelined buffers (native dtype)
    # plus ~2 block-sized f32 temporaries inside the kernel.
    per_b_cost = C * HW * (4 * itemsize + 2 * 4)

    if per_b_cost > vmem_budget_bytes:
        out3 = _cam_forward_hw_tiled(x3, w1t, w2t, vmem_budget_bytes)
        return out3.reshape(B, C, H, W)

    TB = _choose_tb(B, per_b_cost, vmem_budget_bytes)

    block_native = TB * C * HW * itemsize
    block_f32 = TB * C * HW * 4
    w_bytes = (w1t.size * jnp.dtype(w1t.dtype).itemsize
               + w2t.size * jnp.dtype(w2t.dtype).itemsize)
    vmem_need = 4 * block_native + 2 * block_f32 + 2 * w_bytes + (2 << 20)
    # Cap at 48 MiB: leave headroom on v7x (64 MiB physical VMEM per core).
    vmem_limit = int(min(max(vmem_need, 16 << 20), 48 << 20))

    kernel = functools.partial(cam_kernel, inv_hw=1.0 / HW)

    out3 = pl.pallas_call(
        kernel,
        out_shape=jax.ShapeDtypeStruct((B, C, HW), x.dtype),
        grid_spec=pltpu.PrefetchScalarGridSpec(
            num_scalar_prefetch=0,
            grid=(pl.cdiv(B, TB),),
            in_specs=[
                pl.BlockSpec((TB, C, HW), lambda b: (b, 0, 0)),
                pl.BlockSpec(w1t.shape, lambda b: (0, 0)),
                pl.BlockSpec(w2t.shape, lambda b: (0, 0)),
            ],
            out_specs=pl.BlockSpec((TB, C, HW), lambda b: (b, 0, 0)),
        ),
        compiler_params=pltpu.CompilerParams(
            dimension_semantics=("parallel",),
            vmem_limit_bytes=vmem_limit),
    )(x3, w1t, w2t)

    return out3.reshape(B, C, H, W)


def cam_reference(x, w1, w2):
    """Pure-JAX reference mirroring the PyTorch forward exactly."""
    avg = jnp.mean(x, axis=(2, 3))                          # (B, C)
    mx = jnp.max(x, axis=(2, 3))                            # (B, C)

    def mlp(v):
        h = jnp.maximum(v @ w1.T, 0.0)                      # (B, Ch)
        return h @ w2.T                                     # (B, C)

    feat = jax.nn.sigmoid(mlp(avg) + mlp(mx))               # (B, C)
    return x * feat[:, :, None, None]


if __name__ == "__main__":
    key = jax.random.PRNGKey(0)
    ks = jax.random.split(key, 9)

    # Test 1: spatial size already a multiple of 128 (16*16 = 256 lanes).
    B, C, H, W, ratio = 2, 16, 16, 16, 8
    Ch = C // ratio
    x = jax.random.normal(ks[0], (B, C, H, W), dtype=jnp.float32)
    w1 = jax.random.normal(ks[1], (Ch, C), dtype=jnp.float32) * 0.1
    w2 = jax.random.normal(ks[2], (C, Ch), dtype=jnp.float32) * 0.1

    out = jax.block_until_ready(cam_forward(x, w1, w2))
    ref = cam_reference(x, w1, w2)
    assert out.shape == (B, C, H, W)
    assert jnp.allclose(out, ref, atol=1e-5, rtol=1e-5), "mismatch (test 1)"

    # Test 2: ragged spatial size (7*7 = 49 lanes), non-divisor batch tile
    # (B=3 -> TB=2, cdiv grid with a padded tail block).
    B2, C2, H2, W2, r2 = 3, 8, 7, 7, 4
    Ch2 = C2 // r2
    x2 = jax.random.normal(ks[3], (B2, C2, H2, W2), dtype=jnp.float32)
    w1b = jax.random.normal(ks[4], (Ch2, C2), dtype=jnp.float32) * 0.1
    w2b = jax.random.normal(ks[5], (C2, Ch2), dtype=jnp.float32) * 0.1

    out2 = jax.block_until_ready(cam_forward(x2, w1b, w2b))
    ref2 = cam_reference(x2, w1b, w2b)
    assert out2.shape == (B2, C2, H2, W2)
    assert jnp.allclose(out2, ref2, atol=1e-5, rtol=1e-5), "mismatch (test 2)"

    # Test 3: force the HW-tiled fallback path with a tiny VMEM budget
    # (HW = 400 -> THW = 128, ragged tail tile exercises the lane mask).
    B3, C3, H3, W3, r3 = 2, 8, 20, 20, 4
    Ch3 = C3 // r3
    x3 = jax.random.normal(ks[6], (B3, C3, H3, W3), dtype=jnp.float32)
    w1c = jax.random.normal(ks[7], (Ch3, C3), dtype=jnp.float32) * 0.1
    w2c = jax.random.normal(ks[8], (C3, Ch3), dtype=jnp.float32) * 0.1

    out3 = jax.block_until_ready(
        cam_forward(x3, w1c, w2c, vmem_budget_bytes=32 << 10))
    ref3 = cam_reference(x3, w1c, w2c)
    assert out3.shape == (B3, C3, H3, W3)
    assert jnp.allclose(out3, ref3, atol=1e-5, rtol=1e-5), "mismatch (test 3)"

    # Test 4: bf16 activations (gating multiply/store stays in bf16).
    xb = x.astype(jnp.bfloat16)
    outb = jax.block_until_ready(cam_forward(xb, w1, w2))
    refb = cam_reference(xb.astype(jnp.float32), w1, w2)
    assert outb.dtype == jnp.bfloat16
    assert jnp.allclose(outb.astype(jnp.float32), refb,
                        atol=5e-2, rtol=5e-2), "mismatch (test 4)"

    print("KERNEL_OK")
</pallas_src>

<mosaic_0001>
module attributes {stable_mosaic.version = 11 : i64} {
  func.func @cam_kernel(%arg0: i32, %arg1: memref<1x16x256xf32, #tpu.memory_space<vmem>>, %arg2: memref<16x2xf32, #tpu.memory_space<vmem>>, %arg3: memref<2x16xf32, #tpu.memory_space<vmem>>, %arg4: memref<1x16x256xf32, #tpu.memory_space<vmem>>) attributes {dimension_semantics = [#tpu.dimension_semantics<parallel>], iteration_bounds = array<i64: 2>, scalar_prefetch = 0 : i64, scratch_operands = 0 : i64, tpu.core_type = #tpu.core_type<tc>, window_params = [{transform_indices = @transform_0, window_bounds = array<i64: 1, 16, 256>}, {pipeline_mode = #tpu.pipeline_mode<synchronous>, transform_indices = @transform_1, window_bounds = array<i64: 16, 2>}, {pipeline_mode = #tpu.pipeline_mode<synchronous>, transform_indices = @transform_2, window_bounds = array<i64: 2, 16>}, {transform_indices = @transform_3, window_bounds = array<i64: 1, 16, 256>}]} {
    %c0 = arith.constant 0 : index
    %c0_0 = arith.constant 0 : index
    %c0_1 = arith.constant 0 : index
    %0 = vector.load %arg1[%c0, %c0_0, %c0_1] : memref<1x16x256xf32, #tpu.memory_space<vmem>>, vector<1x16x256xf32>
    %cst = arith.constant dense<0.000000e+00> : vector<1x16xf32>
    %1 = vector.multi_reduction <add>, %0, %cst [2] : vector<1x16x256xf32> to vector<1x16xf32>
    %cst_2 = arith.constant 3.906250e-03 : f32
    %2 = vector.broadcast %cst_2 : f32 to vector<1x16xf32>
    %3 = arith.mulf %1, %2 : vector<1x16xf32>
    %cst_3 = arith.constant dense<0xFF800000> : vector<1x16xf32>
    %4 = vector.multi_reduction <maximumf>, %0, %cst_3 [2] : vector<1x16x256xf32> to vector<1x16xf32>
    %5 = tpu.concatenate %3, %4 in 0 : vector<1x16xf32>, vector<1x16xf32> -> vector<2x16xf32>
    %c0_4 = arith.constant 0 : index
    %c0_5 = arith.constant 0 : index
    %6 = vector.load %arg2[%c0_4, %c0_5] : memref<16x2xf32, #tpu.memory_space<vmem>>, vector<16x2xf32>
    %c0_6 = arith.constant 0 : index
    %c0_7 = arith.constant 0 : index
    %7 = vector.load %arg3[%c0_6, %c0_7] : memref<2x16xf32, #tpu.memory_space<vmem>>, vector<2x16xf32>
    %cst_8 = arith.constant dense<0.000000e+00> : vector<2x2xf32>
    %8 = tpu.matmul %5, %6, %cst_8 {dimension_numbers = #tpu.dot_dimension_numbers<[1], [0], [0], [1], [0, 0, 1, 1], [], []>} : vector<2x16xf32>, vector<16x2xf32>, vector<2x2xf32> -> vector<2x2xf32>
    %cst_9 = arith.constant 0.000000e+00 : f32
    %9 = vector.broadcast %cst_9 : f32 to vector<2x2xf32>
    %10 = arith.maximumf %8, %9 : vector<2x2xf32>
    %11 = vector.extract_strided_slice %10 {offsets = [0, 0], sizes = [1, 2], strides = [1, 1]} : vector<2x2xf32> to vector<1x2xf32>
    %12 = vector.extract_strided_slice %10 {offsets = [1, 0], sizes = [1, 2], strides = [1, 1]} : vector<2x2xf32> to vector<1x2xf32>
    %13 = arith.addf %11, %12 : vector<1x2xf32>
    %cst_10 = arith.constant dense<0.000000e+00> : vector<1x16xf32>
    %14 = tpu.matmul %13, %7, %cst_10 {dimension_numbers = #tpu.dot_dimension_numbers<[1], [0], [0], [1], [0, 0, 1, 1], [], []>} : vector<1x2xf32>, vector<2x16xf32>, vector<1x16xf32> -> vector<1x16xf32>
    %15 = arith.negf %14 : vector<1x16xf32>
    %16 = math.exp %15 : vector<1x16xf32>
    %cst_11 = arith.constant 1.000000e+00 : f32
    %17 = vector.broadcast %cst_11 : f32 to vector<1x16xf32>
    %18 = arith.addf %17, %16 : vector<1x16xf32>
    %19 = arith.divf %17, %18 : vector<1x16xf32>
    %20 = vector.shape_cast %19 : vector<1x16xf32> to vector<1x16x1xf32>
    %21 = vector.broadcast %20 : vector<1x16x1xf32> to vector<1x16x256xf32>
    %22 = arith.mulf %0, %21 : vector<1x16x256xf32>
    %c0_12 = arith.constant 0 : index
    %c0_13 = arith.constant 0 : index
    %c0_14 = arith.constant 0 : index
    %23 = vector.load %arg4[%c0_12, %c0_13, %c0_14] : memref<1x16x256xf32, #tpu.memory_space<vmem>>, vector<1x16x256xf32>
    tpu.vector_store %arg4[%c0_12, %c0_13, %c0_14], %22 {strides = array<i32>} : memref<1x16x256xf32, #tpu.memory_space<vmem>>, vector<1x16x256xf32>,
    return
  }
  func.func @transform_0(%arg0: i32) -> (i32, i32, i32) {
    %c0_i32 = arith.constant 0 : i32
    %c0_i32_0 = arith.constant 0 : i32
    %c0_i32_1 = arith.constant 0 : i32
    return %arg0, %c0_i32, %c0_i32_0 : i32, i32, i32
  }
  func.func @transform_1(%arg0: i32) -> (i32, i32) {
    %c0_i32 = arith.constant 0 : i32
    %c0_i32_0 = arith.constant 0 : i32
    %c0_i32_1 = arith.constant 0 : i32
    return %c0_i32, %c0_i32_0 : i32, i32
  }
  func.func @transform_2(%arg0: i32) -> (i32, i32) {
    %c0_i32 = arith.constant 0 : i32
    %c0_i32_0 = arith.constant 0 : i32
    %c0_i32_1 = arith.constant 0 : i32
    return %c0_i32, %c0_i32_0 : i32, i32
  }
  func.func @transform_3(%arg0: i32) -> (i32, i32, i32) {
    %c0_i32 = arith.constant 0 : i32
    %c0_i32_0 = arith.constant 0 : i32
    %c0_i32_1 = arith.constant 0 : i32
    return %arg0, %c0_i32, %c0_i32_0 : i32, i32, i32
  }
}

</mosaic_0001>

<llo_original>
// kernel: tpu_custom_call.1
$region0: #{tpu_custom_call.1}
  #allocation0 [shape = 'u32[]', space=smem, size = 0x4, offset = 0x4, fixed_abs, tag = 'smem constant byte address 0x4 - core index']
  #allocation1 [shape = 'u32[144,128]{1,0:T(1,128)}', space=vmem, size = 0x12000, scoped, tag = 'internal scratch']
  %s0 = inlined_call_operand.hbm [shape: f32[2,16,256], index: 0, kind: input, shape index: {}]
  %s1 = inlined_call_operand.vmem [shape: f32[16,2], index: 1, kind: input, shape index: {}]
  %s2 = inlined_call_operand.vmem [shape: f32[2,16], index: 2, kind: input, shape index: {}]
  %s3 = inlined_call_operand.hbm [shape: f32[2,16,256], index: 3, kind: output, shape index: {}]
  %s4 = sld [smem:[#allocation0]]
  $region49: #{tpu_custom_call.1} parent=0
    _
  %s6 = ssub.s32 1, %s4
  %s7 = scalar_select 0, %s6, %s4
  $region1: #{tpu_custom_call.1} parent=0
    #allocation2 [shape = 'u8[32768]{0}', space=vmem, size = 0x8000, scoped, tag = 'input window, operand 0']
    #allocation3 [shape = 's32[2]{0}', space=sflag, size = 0x8, scoped, tag = 'scoped memory for tpu_custom_call.1']
    #allocation4 [shape = 's32[2]{0}', space=sflag, size = 0x8, scoped, tag = 'scoped memory for tpu_custom_call.1']
    #allocation5 [shape = 'u8[32768]{0}', space=vmem, size = 0x8000, scoped, tag = 'output window, operand 0']
    %8 = vsyncpa [#allocation3], 0
    %s9 = scalar_lea.sflag [#allocation3], 1
    %10 = vsyncpa %s9, 0
    %11 = vsyncpa [#allocation4], 0
    %s12 = scalar_lea.sflag [#allocation4], 1
    %13 = vsyncpa %s12, 0
    loop: start=0, step=1, limit=4
    $region2: #{tpu_custom_call.1} parent=1 // loop_pre_header
      _
    $region3: #{tpu_custom_call.1} parent=1 // loop_header
      %s15 = sphi 0, %s19
      %p16 = scmp.ge.s32.totalorder %s15, 4
      %s25 = sphi 0, %s27
      %s28 = sphi 0, %s25
      %s29 = sphi 0, %s28
      %s45 = sphi 0, %s29
      %s49 = sphi 0, %s49
      %s51 = sphi 0, %s49
      %s52 = sphi 0, %s51
      %s66 = sphi 0, %s52
      %s70 = sphi 0, %s70
      %s72 = sphi 0, %s70
      %s73 = sphi 0, %s72
      %s87 = sphi 0, %s73
      %s93 = sphi 0, %s95
      %s96 = sphi 0, %s93
      %s97 = sphi 0, %s96
      %s113 = sphi 0, %s97
    $region4: #{tpu_custom_call.1} parent=1 // loop_header_branch
      %18 = sbr.rel (%p16) target = $region8
    $region5: #{tpu_custom_call.1} parent=1 // loop_body
      %s20 = ssub.s32 %s15, 1
      %s21 = ssub.s32 %s15, 2
      %s22 = sadd.s32 %s15, 1
      %s23 = ssub.s32 %s15, %s22
      %p24 = scmp.eq.s32.totalorder %s23, 0
      %s26 = sadd.s32 %s25, 1
      %s27 = scalar_select %p24, %s25, %s26
      %p30 = pneg %p24
      %p31 = scmp.eq.s32.totalorder %s15, 1
      %p32 = por %p30, %p31
      %p33 = scmp.ne.s32.totalorder %s25, %s28
      %p34 = scmp.eq.s32.totalorder %s15, 0
      %p35 = por %p33, %p34
      %p36 = scmp.ne.s32.totalorder %s25, %s28
      %p37 = scmp.eq.s32.totalorder %s20, 1
      %p38 = por %p36, %p37
      %p39 = scmp.ne.s32.totalorder %s28, %s29
      %p40 = scmp.eq.s32.totalorder %s20, 0
      %p41 = por %p39, %p40
      %p42 = scmp.ne.s32.totalorder %s28, %s29
      %p43 = scmp.eq.s32.totalorder %s21, 1
      %p44 = por %p42, %p43
      %p46 = scmp.ne.s32.totalorder %s29, %s45
      %p47 = scmp.eq.s32.totalorder %s21, 0
      %p48 = por %p46, %p47
      %s50 = sadd.s32 %s49, 1
      %p53 = scmp.eq.s32.totalorder %s15, 1
      %p54 = scmp.ne.s32.totalorder %s49, %s51
      %p55 = scmp.eq.s32.totalorder %s15, 0
      %p56 = por %p54, %p55
      %p57 = scmp.ne.s32.totalorder %s49, %s51
      %p58 = scmp.eq.s32.totalorder %s20, 1
      %p59 = por %p57, %p58
      %p60 = scmp.ne.s32.totalorder %s51, %s52
      %p61 = scmp.eq.s32.totalorder %s20, 0
      %p62 = por %p60, %p61
      %p63 = scmp.ne.s32.totalorder %s51, %s52
      %p64 = scmp.eq.s32.totalorder %s21, 1
      %p65 = por %p63, %p64
      %p67 = scmp.ne.s32.totalorder %s52, %s66
      %p68 = scmp.eq.s32.totalorder %s21, 0
      %p69 = por %p67, %p68
      %s71 = sadd.s32 %s70, 1
      %p74 = scmp.eq.s32.totalorder %s15, 1
      %p75 = scmp.ne.s32.totalorder %s70, %s72
      %p76 = scmp.eq.s32.totalorder %s15, 0
      %p77 = por %p75, %p76
      %p78 = scmp.ne.s32.totalorder %s70, %s72
      %p79 = scmp.eq.s32.totalorder %s20, 1
      %p80 = por %p78, %p79
      %p81 = scmp.ne.s32.totalorder %s72, %s73
      %p82 = scmp.eq.s32.totalorder %s20, 0
      %p83 = por %p81, %p82
      %p84 = scmp.ne.s32.totalorder %s72, %s73
      %p85 = scmp.eq.s32.totalorder %s21, 1
      %p86 = por %p84, %p85
      %p88 = scmp.ne.s32.totalorder %s73, %s87
      %p89 = scmp.eq.s32.totalorder %s21, 0
      %p90 = por %p88, %p89
      %s91 = ssub.s32 %s15, %s22
      %p92 = scmp.eq.s32.totalorder %s91, 0
      %s94 = sadd.s32 %s93, 1
      %s95 = scalar_select %p92, %s93, %s94
      %p98 = pneg %p92
      %p99 = scmp.eq.s32.totalorder %s15, 1
      %p100 = por %p98, %p99
      %p101 = scmp.ne.s32.totalorder %s93, %s96
      %p102 = scmp.eq.s32.totalorder %s15, 0
      %p103 = por %p101, %p102
      %p104 = scmp.ne.s32.totalorder %s93, %s96
      %p105 = scmp.eq.s32.totalorder %s20, 1
      %p106 = por %p104, %p105
      %p107 = scmp.ne.s32.totalorder %s96, %s97
      %p108 = scmp.eq.s32.totalorder %s20, 0
      %p109 = por %p107, %p108
      %p110 = scmp.ne.s32.totalorder %s96, %s97
      %p111 = scmp.eq.s32.totalorder %s21, 1
      %p112 = por %p110, %p111
      %p114 = scmp.ne.s32.totalorder %s97, %s113
      %p115 = scmp.eq.s32.totalorder %s21, 0
      %p116 = por %p114, %p115
      %p117 = scmp.le.s32.totalorder 1, %s15
      %p118 = scmp.lt.s32.totalorder %s15, 3
      %p119 = pnand %p117, %p118
      %p120 = pneg %p119
      // Predicated region
      $region9: #{tpu_custom_call.1} parent=5 // pred_check
        _
      $region10: #{tpu_custom_call.1} parent=5 // pred_check_branch
        %122 = sbr.rel (%p119) target = $region12
      $region11: #{tpu_custom_call.1} parent=5 // pred_region
        %s123 = ssub.s32 %s15, 1
        // Predicated region
        $region13: #{tpu_custom_call.1} parent=11 // pred_check
          %p124 = pneg %p62
        $region14: #{tpu_custom_call.1} parent=11 // pred_check_branch
          %126 = sbr.rel (%p124) target = $region16
        $region15: #{tpu_custom_call.1} parent=11 // pred_region
          _
        $region16: #{tpu_custom_call.1} parent=11 // pred_fallthru
          _
        // Predicated region
        $region17: #{tpu_custom_call.1} parent=11 // pred_check
          %p127 = pneg %p83
        $region18: #{tpu_custom_call.1} parent=11 // pred_check_branch
          %129 = sbr.rel (%p127) target = $region20
        $region19: #{tpu_custom_call.1} parent=11 // pred_region
          _
        $region20: #{tpu_custom_call.1} parent=11 // pred_fallthru
          _
      $region12: #{tpu_custom_call.1} parent=5 // pred_fallthru
        _
      %p130 = scmp.lt.s32.totalorder %s15, 2
      // Predicated region
      $region21: #{tpu_custom_call.1} parent=5 // pred_check
        %p131 = pneg %p130
      $region22: #{tpu_custom_call.1} parent=5 // pred_check_branch
        %133 = sbr.rel (%p131) target = $region24
      $region23: #{tpu_custom_call.1} parent=5 // pred_region
        // Predicated region
        $region25: #{tpu_custom_call.1} parent=23 // pred_check
          %p134 = pneg %p35
        $region26: #{tpu_custom_call.1} parent=23 // pred_check_branch
          %136 = sbr.rel (%p134) target = $region28
        $region27: #{tpu_custom_call.1} parent=23 // pred_region
          %s137 = sand.u32 %s25, 1
          %s138 = scalar_lea.sflag [#allocation3], %s137
          %s139 = sand.u32 %s25, 1
          %s140 = smul.addr %s139, 32
          %s141 = scalar_lea.vmem [#allocation2], %s140
          %s143 = ssub.s32 512, 512
          %144 = vsyncadd %s138, %s143
          %s145 = smul.addr %s15, 4
          %s146 = smul.addr %s145, 128
          %s147 = scalar_lea.hbm %s0, %s146
          %s148 = sshll.u32 %s141, 4
          %s149 = int_to_ptr.vmem [resolvable:$true] %s148
          %154 = dma.hbm_to_vmem [thread:$0]  %s147, 512, %s149, %s138, 256, 256, 16
        $region28: #{tpu_custom_call.1} parent=23 // pred_fallthru
          _
      $region24: #{tpu_custom_call.1} parent=5 // pred_fallthru
        _
      %p155 = scmp.le.s32.totalorder 1, %s15
      %p156 = scmp.lt.s32.totalorder %s15, 3
      %p157 = pnand %p155, %p156
      %p158 = pneg %p157
      // Predicated region
      $region29: #{tpu_custom_call.1} parent=5 // pred_check
        _
      $region30: #{tpu_custom_call.1} parent=5 // pred_check_branch
        %160 = sbr.rel (%p157) target = $region32
      $region31: #{tpu_custom_call.1} parent=5 // pred_region
        %s161 = ssub.s32 %s15, 1
        %s162 = sand.u32 %s28, 1
        %s163 = scalar_lea.sflag [#allocation3], %s162
        %s164 = sand.u32 %s28, 1
        %s165 = smul.addr %s164, 32
        %s166 = scalar_lea.vmem [#allocation2], %s165
        // Predicated region
        $region33: #{tpu_custom_call.1} parent=31 // pred_check
          %p167 = pneg %p41
        $region34: #{tpu_custom_call.1} parent=31 // pred_check_branch
          %169 = sbr.rel (%p167) target = $region36
        $region35: #{tpu_custom_call.1} parent=31 // pred_region
          %170 = dma.done %s163, 512
        $region36: #{tpu_custom_call.1} parent=31 // pred_fallthru
          _
        %s171 = sand.u32 %s28, 1
        %s172 = scalar_lea.sflag [#allocation3], %s171
        %s173 = sand.u32 %s28, 1
        %s174 = smul.addr %s173, 32
        %s175 = scalar_lea.vmem [#allocation2], %s174
        %p176 = pneg %p41
        %p177 = pneg %p38
        %p178 = pneg %p62
        %p179 = pneg %p59
        %p180 = pneg %p83
        %p181 = pneg %p80
        %p182 = pneg %p109
        %p183 = pneg %p106
        %s184 = sand.u32 %s96, 1
        %s185 = scalar_lea.sflag [#allocation4], %s184
        %s186 = sand.u32 %s96, 1
        %s187 = smul.addr %s186, 32
        %s188 = scalar_lea.vmem [#allocation5], %s187
        %v189 = vld [vmem:[%s166] sm:$0xff]
        %v190 = vld [vmem:[%s166 + $0x8] sm:$0xff]
        %v191 = vld [vmem:[%s166 + $0x10] sm:$0xff]
        %v192 = vld [vmem:[%s166 + $0x18] sm:$0xff]
        %v193 = vadd.f32 %v189, %v190
        %194 = vadd.xlane.f32.xlu0 %v193
        %v195 = vpop.xlane.xlu0 %194
        %v196 = vadd.f32 %v191, %v192
        %197 = vadd.xlane.f32.xlu0 %v196
        %v198 = vpop.xlane.xlu0 %197
        %v199 = vmul.f32 %v195, 0.00390625
        %v200 = vmul.f32 %v198, 0.00390625
        %v201 = vmax.f32 %v189, %v190
        %202 = vmax.xlane.f32.xlu0 %v201
        %v203 = vpop.xlane.xlu0 %202
        %v204 = vmax.f32 %v191, %v192
        %205 = vmax.xlane.f32.xlu0 %v204
        %v206 = vpop.xlane.xlu0 %205
        %v209 = vlaneseq
        %v210 = vand.u32 %v209, 127
        %v211 = vlaneseq
        %v212 = vshrl.u32 %v211, 7
        %v213 = vsub.s32 %v210, %v212
        %v214 = vrot.slane %v199, %v213
        %v215 = vadd.s32 %v210, 4294967288
        %v216 = vlaneseq
        %v217 = vshrl.u32 %v216, 7
        %v218 = vsub.s32 %v215, %v217
        %v219 = vrot.slane %v200, %v218
        %vm220 = vcmask 130112
        %v221 = vsel %vm220, %v219, %v214
        %v225 = vlaneseq
        %v226 = vshrl.u32 %v225, 7
        %v227 = vsub.s32 %v210, %v226
        %v228 = vrot.slane %v203, %v227
        %v229 = vlaneseq
        %v230 = vshrl.u32 %v229, 7
        %v231 = vsub.s32 %v215, %v230
        %v232 = vrot.slane %v206, %v231
        %v233 = vsel %vm220, %v232, %v228
        %vm235 = vcmask 1040384
        %v236 = vsel %vm235, %v221, %v233
        %v237 = vld [vmem:[%s1] sm:$0xff]
        %v238 = vld [vmem:[%s1 + $0x8] sm:$0xff]
        %v239 = vld [vmem:[%s2] sm:$0x3]
        %vm240 = vcmask 130048
        %v242 = vsel %vm240, %v236, 0
        %244 = vmatprep.subr.mxu0 0.0
        %245 = vmatpush1.msra.mxu0 %v237
        %246 = vmatprep.subr.mxu0 0.0
        %247 = vmatpush1.msra.mxu0 %v238
        %248 = vmatprep.subr.mxu0 0.0
        %249 = vmatpush1.msra.mxu0 0.0
        %250 = vmatprep.subr.mxu0 0.0
        %251 = vmatpush1.msra.mxu0 0.0
        %252 = vmatprep.subr.mxu0 0.0
        %253 = vmatpush1.msra.mxu0 0.0
        %254 = vmatprep.subr.mxu0 0.0
        %255 = vmatpush1.msra.mxu0 0.0
        %256 = vmatprep.subr.mxu0 0.0
        %257 = vmatpush1.msra.mxu0 0.0
        %258 = vmatprep.subr.mxu0 0.0
        %259 = vmatpush1.msra.mxu0 0.0
        %260 = vmatprep.subr.mxu0 0.0
        %261 = vmatpush1.msra.mxu0 0.0
        %262 = vmatprep.subr.mxu0 0.0
        %263 = vmatpush1.msra.mxu0 0.0
        %264 = vmatprep.subr.mxu0 0.0
        %265 = vmatpush1.msra.mxu0 0.0
        %266 = vmatprep.subr.mxu0 0.0
        %267 = vmatpush1.msra.mxu0 0.0
        %268 = vmatprep.subr.mxu0 0.0
        %269 = vmatpush1.msra.mxu0 0.0
        %270 = vmatprep.subr.mxu0 0.0
        %271 = vmatpush1.msra.mxu0 0.0
        %272 = vmatprep.subr.mxu0 0.0
        %273 = vmatpush1.msra.mxu0 0.0
        %274 = vmatprep.subr.mxu0 0.0
        %275 = vmatpush1.msra.mxu0 0.0
        %276 = vmatprep.subr.mxu0 0.0
        %277 = vmatpush1.msra.mxu0 0.0
        %278 = vmatprep.subr.mxu0 0.0
        %279 = vmatpush1.msra.mxu0 0.0
        %280 = vmatprep.subr.mxu0 0.0
        %281 = vmatpush1.msra.mxu0 0.0
        %282 = vmatprep.subr.mxu0 0.0
        %283 = vmatpush1.msra.mxu0 0.0
        %284 = vmatprep.subr.mxu0 0.0
        %285 = vmatpush1.msra.mxu0 0.0
        %286 = vmatprep.subr.mxu0 0.0
        %287 = vmatpush1.msra.mxu0 0.0
        %288 = vmatprep.subr.mxu0 0.0
        %289 = vmatpush1.msra.mxu0 0.0
        %290 = vmatprep.subr.mxu0 0.0
        %291 = vmatpush1.msra.mxu0 0.0
        %292 = vmatprep.subr.mxu0 0.0
        %293 = vmatpush1.msra.mxu0 0.0
        %294 = vmatprep.subr.mxu0 0.0
        %295 = vmatpush1.msra.mxu0 0.0
        %296 = vmatprep.subr.mxu0 0.0
        %297 = vmatpush1.msra.mxu0 0.0
        %298 = vmatprep.subr.mxu0 0.0
        %299 = vmatpush1.msra.mxu0 0.0
        %300 = vmatprep.subr.mxu0 0.0
        %301 = vmatpush1.msra.mxu0 0.0
        %302 = vmatprep.subr.mxu0 0.0
        %303 = vmatpush1.msra.mxu0 0.0
        %304 = vmatprep.subr.mxu0 0.0
        %305 = vmatpush1.msra.mxu0 0.0
        %306 = vmatprep.subr.mxu0 0.0
        %307 = vmatpush1.msra.mxu0 0.0
        %308 = vmatprep.mubr.f32.mxu0 0.0
        %309 = vmatmul.mubr.f32.gmra.mrb[0].mxu0 %v242
        %v310 = vpop.f32.mrb[0].mxu0
        %v311 = vadd.f32 0.0, %v310
        %v312 = vpop.f32.mrb[0].mxu0
        %313 = vdwg.mxu0
        %v314 = vmax.f32 %v311, 0.0
        %v316 = vrot.slane %v314, 1
        %v318 = vadd.f32 %v314, %v316
        %vm319 = vcmask 15360
        %v321 = vsel %vm319, %v318, 0
        %vm323 = vcmask 1041408
        %v325 = vsel %vm323, %v239, 0
        %327 = vmatprep.subr.mxu0 0.0
        %328 = vmatpush1.msra.mxu0 %v325
        %329 = vmatprep.subr.mxu0 0.0
        %330 = vmatpush1.msra.mxu0 0.0
        %331 = vmatprep.subr.mxu0 0.0
        %332 = vmatpush1.msra.mxu0 0.0
        %333 = vmatprep.subr.mxu0 0.0
        %334 = vmatpush1.msra.mxu0 0.0
        %335 = vmatprep.subr.mxu0 0.0
        %336 = vmatpush1.msra.mxu0 0.0
        %337 = vmatprep.subr.mxu0 0.0
        %338 = vmatpush1.msra.mxu0 0.0
        %339 = vmatprep.subr.mxu0 0.0
        %340 = vmatpush1.msra.mxu0 0.0
        %341 = vmatprep.subr.mxu0 0.0
        %342 = vmatpush1.msra.mxu0 0.0
        %343 = vmatprep.subr.mxu0 0.0
        %344 = vmatpush1.msra.mxu0 0.0
        %345 = vmatprep.subr.mxu0 0.0
        %346 = vmatpush1.msra.mxu0 0.0
        %347 = vmatprep.subr.mxu0 0.0
        %348 = vmatpush1.msra.mxu0 0.0
        %349 = vmatprep.subr.mxu0 0.0
        %350 = vmatpush1.msra.mxu0 0.0
        %351 = vmatprep.subr.mxu0 0.0
        %352 = vmatpush1.msra.mxu0 0.0
        %353 = vmatprep.subr.mxu0 0.0
        %354 = vmatpush1.msra.mxu0 0.0
        %355 = vmatprep.subr.mxu0 0.0
        %356 = vmatpush1.msra.mxu0 0.0
        %357 = vmatprep.subr.mxu0 0.0
        %358 = vmatpush1.msra.mxu0 0.0
        %359 = vmatprep.subr.mxu0 0.0
        %360 = vmatpush1.msra.mxu0 0.0
        %361 = vmatprep.subr.mxu0 0.0
        %362 = vmatpush1.msra.mxu0 0.0
        %363 = vmatprep.subr.mxu0 0.0
        %364 = vmatpush1.msra.mxu0 0.0
        %365 = vmatprep.subr.mxu0 0.0
        %366 = vmatpush1.msra.mxu0 0.0
        %367 = vmatprep.subr.mxu0 0.0
        %368 = vmatpush1.msra.mxu0 0.0
        %369 = vmatprep.subr.mxu0 0.0
        %370 = vmatpush1.msra.mxu0 0.0
        %371 = vmatprep.subr.mxu0 0.0
        %372 = vmatpush1.msra.mxu0 0.0
        %373 = vmatprep.subr.mxu0 0.0
        %374 = vmatpush1.msra.mxu0 0.0
        %375 = vmatprep.subr.mxu0 0.0
        %376 = vmatpush1.msra.mxu0 0.0
        %377 = vmatprep.subr.mxu0 0.0
        %378 = vmatpush1.msra.mxu0 0.0
        %379 = vmatprep.subr.mxu0 0.0
        %380 = vmatpush1.msra.mxu0 0.0
        %381 = vmatprep.subr.mxu0 0.0
        %382 = vmatpush1.msra.mxu0 0.0
        %383 = vmatprep.subr.mxu0 0.0
        %384 = vmatpush1.msra.mxu0 0.0
        %385 = vmatprep.subr.mxu0 0.0
        %386 = vmatpush1.msra.mxu0 0.0
        %387 = vmatprep.subr.mxu0 0.0
        %388 = vmatpush1.msra.mxu0 0.0
        %389 = vmatprep.subr.mxu0 0.0
        %390 = vmatpush1.msra.mxu0 0.0
        %391 = vmatprep.mubr.f32.mxu0 0.0
        %392 = vmatmul.mubr.f32.gmra.mrb[0].mxu0 %v321
        %v393 = vpop.f32.mrb[0].mxu0
        %v394 = vadd.f32 0.0, %v393
        %v395 = vpop.f32.mrb[0].mxu0
        %396 = vdwg.mxu0
        %v397 = vxor.u32 %v394, 2147483648
        %v398 = vmul.f32 %v397, 1.442695
        %v399 = vpow.pop %v398
        %v400 = vadd.f32 %v399, 1.0
        %v401 = vrcp.pop %v400
        %v402 = vmul.f32 1.0, %v401
        %v403 = vlaneseq
        %v404 = vshrl.u32 %v403, 7
        %v405 = vsub.s32 0, %v404
        %v406 = vrot.slane %v402, %v405
        %408 = vbcast.lane.b32.xlu0 %v406, 256
        %v409 = vpop.permute.xlu0 %408
        %s411 = sor.u32 256, 8
        %412 = vbcast.lane.b32.xlu0 %v406, %s411
        %v413 = vpop.permute.xlu0 %412
        %v414 = vmul.f32 %v189, %v409
        %v415 = vmul.f32 %v190, %v409
        %v416 = vmul.f32 %v191, %v413
        %v417 = vmul.f32 %v192, %v413
        %418 = vst [vmem:[%s188] sm:$0xff] %v414
        %419 = vst [vmem:[%s188 + $0x8] sm:$0xff] %v415
        %420 = vst [vmem:[%s188 + $0x10] sm:$0xff] %v416
        %421 = vst [vmem:[%s188 + $0x18] sm:$0xff] %v417
        %s422 = sand.u32 %s96, 1
        %s423 = scalar_lea.sflag [#allocation4], %s422
        %s424 = sand.u32 %s96, 1
        %s425 = smul.addr %s424, 32
        %s426 = scalar_lea.vmem [#allocation5], %s425
        // Predicated region
        $region37: #{tpu_custom_call.1} parent=31 // pred_check
          %p427 = pneg %p106
        $region38: #{tpu_custom_call.1} parent=31 // pred_check_branch
          %429 = sbr.rel (%p427) target = $region40
        $region39: #{tpu_custom_call.1} parent=31 // pred_region
          %s431 = ssub.s32 512, 512
          %432 = vsyncadd %s423, %s431
          %s433 = smul.addr %s20, 4
          %s434 = smul.addr %s433, 128
          %s435 = scalar_lea.hbm %s3, %s434
          %s436 = sshll.u32 %s426, 4
          %s437 = int_to_ptr.vmem [resolvable:$true] %s436
          %442 = dma.vmem_to_hbm [thread:$0]  %s437, 512, %s435, %s423, 256, 256, 16
        $region40: #{tpu_custom_call.1} parent=31 // pred_fallthru
          _
      $region32: #{tpu_custom_call.1} parent=5 // pred_fallthru
        _
      %p443 = scmp.le.s32.totalorder 2, %s15
      // Predicated region
      $region41: #{tpu_custom_call.1} parent=5 // pred_check
        %p444 = pneg %p443
      $region42: #{tpu_custom_call.1} parent=5 // pred_check_branch
        %446 = sbr.rel (%p444) target = $region44
      $region43: #{tpu_custom_call.1} parent=5 // pred_region
        %s447 = ssub.s32 %s15, 2
        // Predicated region
        $region45: #{tpu_custom_call.1} parent=43 // pred_check
          %p448 = pneg %p112
        $region46: #{tpu_custom_call.1} parent=43 // pred_check_branch
          %450 = sbr.rel (%p448) target = $region48
        $region47: #{tpu_custom_call.1} parent=43 // pred_region
          %s451 = sand.u32 %s97, 1
          %s452 = scalar_lea.sflag [#allocation4], %s451
          %s453 = sand.u32 %s97, 1
          %s454 = smul.addr %s453, 32
          %s455 = scalar_lea.vmem [#allocation5], %s454
          %456 = dma.done %s452, 512
        $region48: #{tpu_custom_call.1} parent=43 // pred_fallthru
          _
      $region44: #{tpu_custom_call.1} parent=5 // pred_fallthru
        _
    $region6: #{tpu_custom_call.1} parent=1 // loop_footer
      %s19 = sadd.s32 1, %s15
    $region7: #{tpu_custom_call.1} parent=1 // loop_footer_branch
      %14 = sbr.rel target = $region3
    $region8: #{tpu_custom_call.1} parent=1 // loop_exit
      _
    %457 = vsyncpa [#allocation3], 1
    %s458 = scalar_lea.sflag [#allocation3], 1
    %459 = vsyncpa %s458, 1
    %460 = vsyncpa [#allocation4], 1
    %s461 = scalar_lea.sflag [#allocation4], 1
    %462 = vsyncpa %s461, 1

</llo_original>
